<compile_context>
chip_gen: v7x
topology: tpu7x:2x2x1
jax: 0.10.0
libtpu: 0.0.40
codegen_flags: <defaults>
</compile_context>

<pallas_src>
import functools

import numpy as np
import jax
import jax.numpy as jnp
from jax.experimental import pallas as pl
from jax.experimental.pallas import tpu as pltpu

EMBED = 128   # embedding_size in the PyTorch module


def _round_up(x, m):
    return ((x + m - 1) // m) * m


def _pick_bm(batch, block_m):
    """Bucket the batch tile to a small fixed set of sizes (avoids recompiles)
    while (a) keeping tiles large enough to amortize per-step overhead and
    (b) guaranteeing >= 2 grid steps for large batches (v7x megacore)."""
    block_m = max(256, _round_up(block_m, 256))
    if batch <= 256:
        # Tiny batch: one block, power-of-two bucket (>=16 for bf16 sublane pack).
        return max(16, int(pl.next_power_of_2(batch)))
    target = pl.cdiv(batch, 2)   # ensure at least two grid steps
    bm = 256
    while bm * 2 <= min(block_m, target):
        bm *= 2
    return bm


def _res_dyn_mlp_kernel(x_ref, w1_ref, w2_ref, w3_ref, c_ref, o_ref, *,
                        compute_dtype, apply_affine):
    out_dim = o_ref.shape[-1]

    # MXU operands in compute_dtype (bf16 on v6e/v7x for throughput); f32
    # accumulation via preferred_element_type; all elementwise work stays f32.
    x = x_ref[...].astype(compute_dtype)

    # Linear(input_dim, 128) + ReLU     (Dropout p=0 is identity)
    h1 = jnp.dot(x, w1_ref[...], preferred_element_type=jnp.float32) + c_ref[0:1, :]
    h1 = jnp.maximum(h1, 0.0).astype(compute_dtype)

    # Linear(128, 128) + ReLU
    h2 = jnp.dot(h1, w2_ref[...], preferred_element_type=jnp.float32) + c_ref[1:2, :]
    h2 = jnp.maximum(h2, 0.0).astype(compute_dtype)

    # Linear(128, output_dim) + Tanh
    raw = jnp.tanh(
        jnp.dot(h2, w3_ref[...], preferred_element_type=jnp.float32)
        + c_ref[2:3, :out_dim])

    if apply_affine:
        raw = (raw + c_ref[3:4, :out_dim]) * c_ref[4:5, :out_dim]

    # TODO(synk): out_dim is 3-6, so this is a masked (3/128-lane) store plus a
    # narrow HBM writeback; if a trace shows store/writeback time dominating,
    # pack the result lane-dense ((bm*out_dim//128, 128)) here and reshape in
    # the wrapper instead.
    o_ref[...] = raw.astype(o_ref.dtype)


@functools.partial(jax.jit, static_argnames=("bm", "use_bf16", "apply_affine"))
def _forward(x, w1, w2, w3, consts, *, bm, use_bf16, apply_affine):
    B, in_dim = x.shape
    out_dim = w3.shape[1]
    compute_dtype = jnp.bfloat16 if use_bf16 else jnp.float32

    # Tiny batches (single block): pad up to the bucketed tile so the block
    # never exceeds the array. Large batches run un-padded with a ragged
    # (masked) last block via cdiv — no extra HBM pass over x or out.
    pad = bm - B if B < bm else 0
    if pad:
        x = jnp.pad(x, ((0, pad), (0, 0)))
    B_eff = B + pad
    grid = (pl.cdiv(B_eff, bm),)

    full = lambda i: (0, 0)   # weights / constants: same whole block every step
    in_specs = [
        pl.BlockSpec((bm, in_dim), lambda i: (i, 0)),   # x tile
        pl.BlockSpec((in_dim, EMBED), full),            # w1 (pre-transposed)
        pl.BlockSpec((EMBED, EMBED), full),             # w2
        pl.BlockSpec((EMBED, out_dim), full),           # w3
        pl.BlockSpec((8, 128), full),                   # packed b1/b2/b3/offset/scale
    ]

    weight_elems = in_dim * EMBED + EMBED * EMBED + EMBED * out_dim
    wbytes = 2 if use_bf16 else 4
    cost = pl.CostEstimate(
        flops=2 * B_eff * weight_elems,
        transcendentals=B_eff * out_dim,
        bytes_accessed=(B_eff * (in_dim + out_dim) * 4
                        + weight_elems * wbytes + 8 * 128 * 4),
    )

    # Per-step VMEM estimate (double-buffered x/out, f32 + compute-dtype temps);
    # only raise the scoped-VMEM limit when we'd exceed v5e's ~16 MiB default.
    per_row = (2 * in_dim * 4 + in_dim * wbytes          # x (dbl-buffered) + cast
               + 2 * EMBED * (4 + wbytes)                # h1, h2 f32 + cast copies
               + 2 * out_dim * 4)                        # out (dbl-buffered)
    vmem_est = bm * per_row + 2 * weight_elems * wbytes + 2 * 8 * 128 * 4
    vmem_limit = None
    if vmem_est > (12 << 20):
        vmem_limit = min(int(vmem_est * 3) // 2, 56 << 20)

    kernel = functools.partial(_res_dyn_mlp_kernel,
                               compute_dtype=compute_dtype,
                               apply_affine=apply_affine)

    out = pl.pallas_call(
        kernel,
        out_shape=jax.ShapeDtypeStruct((B_eff, out_dim), x.dtype),
        grid_spec=pltpu.PrefetchScalarGridSpec(
            num_scalar_prefetch=0,
            grid=grid,
            in_specs=in_specs,
            out_specs=pl.BlockSpec((bm, out_dim), lambda i: (i, 0)),
        ),
        compiler_params=pltpu.CompilerParams(
            dimension_semantics=("parallel",),
            vmem_limit_bytes=vmem_limit),
        cost_estimate=cost,
    )(x, w1, w2, w3, consts)

    return out[:B] if pad else out


def res_dyn_mlp_forward(x, params, *, block_m=4096, use_bf16=True):
    """x: [B, input_dim] float32. params: dict from init_params."""
    apply_affine = bool(params["apply_affine"])      # static, decided at init
    bm = _pick_bm(int(x.shape[0]), block_m)
    if use_bf16:
        w1, w2, w3 = params["w1_bf16"], params["w2_bf16"], params["w3_bf16"]
    else:
        w1, w2, w3 = params["w1"], params["w2"], params["w3"]
    return _forward(x, w1, w2, w3, params["consts"],
                    bm=bm, use_bf16=use_bf16, apply_affine=apply_affine)


def init_params(key, input_dim, output_dim, res_dyn_param_dim=1):
    """Mirrors the PyTorch __init__ (orthogonal W, uniform b, frozen affine).
    Weights are stored pre-transposed [in, out]; frozen bf16 copies and the
    packed (8,128) bias/offset/scale constant tile are built once here."""
    k1, k2, k3, kb1, kb2, kb3 = jax.random.split(key, 6)
    ortho = jax.nn.initializers.orthogonal(scale=1.0)

    # nn.Linear weight is [out, in]; store transposed [in, out] for the kernel.
    w1 = ortho(k1, (EMBED, input_dim), jnp.float32).T
    w2 = ortho(k2, (EMBED, EMBED), jnp.float32).T
    w3 = ortho(k3, (output_dim, EMBED), jnp.float32).T
    b1 = jax.random.uniform(kb1, (1, EMBED), jnp.float32, -0.2, 0.21)
    b2 = jax.random.uniform(kb2, (1, EMBED), jnp.float32, -0.2, 0.21)
    b3 = jax.random.uniform(kb3, (1, output_dim), jnp.float32, -0.2, 0.21)

    if res_dyn_param_dim == 0:
        offset = jnp.array([[-0.25, -0.25, 0.0, 0.0, 0.0, 0.0]], jnp.float32)
        scale = jnp.array([[2.0, 2.0, 2.0, 0.2, 0.2, 0.1]], jnp.float32)
    else:
        offset = jnp.array([[0.0, 0.0, 0.0]], jnp.float32)
        scale = jnp.array([[1.0, 1.0, 1.0]], jnp.float32)

    # Pack all small per-feature constants into one (8,128) f32 tile:
    # row 0: b1, row 1: b2, row 2: b3, row 3: offset, row 4: scale.
    consts = jnp.zeros((8, 128), jnp.float32)
    consts = consts.at[0, :EMBED].set(b1[0])
    consts = consts.at[1, :EMBED].set(b2[0])
    consts = consts.at[2, :output_dim].set(b3[0])
    consts = consts.at[3, :offset.shape[1]].set(offset[0])
    consts = consts.at[4, :scale.shape[1]].set(scale[0])

    # Identity offset/scale (res_dyn_param_dim=1) is specialized away; decided
    # ONCE here (host-side) so calls never need a device->host sync and the
    # wrapper stays jit-safe.
    apply_affine = not (np.allclose(np.asarray(offset), 0.0)
                        and np.allclose(np.asarray(scale), 1.0))

    return dict(
        w1=w1, w2=w2, w3=w3,
        w1_bf16=w1.astype(jnp.bfloat16),
        w2_bf16=w2.astype(jnp.bfloat16),
        w3_bf16=w3.astype(jnp.bfloat16),
        b1=b1, b2=b2, b3=b3, offset=offset, scale=scale,
        consts=consts, apply_affine=apply_affine)


def reference_forward(x, p, use_bf16=False):
    dt = jnp.bfloat16 if use_bf16 else jnp.float32
    h1 = jnp.maximum(
        jnp.dot(x.astype(dt), p["w1"].astype(dt),
                preferred_element_type=jnp.float32) + p["b1"], 0.0)
    h2 = jnp.maximum(
        jnp.dot(h1.astype(dt), p["w2"].astype(dt),
                preferred_element_type=jnp.float32) + p["b2"], 0.0)
    raw = jnp.tanh(
        jnp.dot(h2.astype(dt), p["w3"].astype(dt),
                preferred_element_type=jnp.float32) + p["b3"])
    return (raw + p["offset"]) * p["scale"]


if __name__ == "__main__":
    key = jax.random.PRNGKey(0)
    k_p1, k_p2, k_x1, k_x2, k_x3 = jax.random.split(key, 5)

    # Config A: res_dyn_param_dim=1 (identity offset/scale), tiny ragged batch (13).
    in_dim, out_dim, batch = 12, 3, 13
    params = init_params(k_p1, in_dim, out_dim, res_dyn_param_dim=1)
    x = jax.random.normal(k_x1, (batch, in_dim), jnp.float32)

    out_bf16 = jax.block_until_ready(res_dyn_mlp_forward(x, params, use_bf16=True))
    out_f32 = jax.block_until_ready(res_dyn_mlp_forward(x, params, use_bf16=False))
    ref_f32 = reference_forward(x, params, use_bf16=False)
    ref_bf16 = reference_forward(x, params, use_bf16=True)
    assert out_f32.shape == (batch, out_dim)
    assert jnp.allclose(out_f32, ref_f32, atol=1e-5, rtol=1e-5)
    assert jnp.allclose(out_bf16, ref_bf16, atol=1e-4, rtol=1e-4)
    assert jnp.allclose(out_bf16, ref_f32, atol=1e-1)   # bf16-matmul semantics sanity

    # Config B: res_dyn_param_dim=0 (non-identity offset/scale path), batch=32.
    in_dim2, out_dim2, batch2 = 16, 6, 32
    params2 = init_params(k_p2, in_dim2, out_dim2, res_dyn_param_dim=0)
    x2 = jax.random.normal(k_x2, (batch2, in_dim2), jnp.float32)
    out2 = jax.block_until_ready(res_dyn_mlp_forward(x2, params2, use_bf16=False))
    ref2 = reference_forward(x2, params2, use_bf16=False)
    assert out2.shape == (batch2, out_dim2)
    assert jnp.allclose(out2, ref2, atol=1e-5, rtol=1e-5)

    # Config C: multi-step grid with a ragged (masked) last block, no padding pass.
    batch3 = 300
    x3 = jax.random.normal(k_x3, (batch3, in_dim), jnp.float32)
    out3 = jax.block_until_ready(res_dyn_mlp_forward(x3, params, use_bf16=False))
    ref3 = reference_forward(x3, params, use_bf16=False)
    assert out3.shape == (batch3, out_dim)
    assert jnp.allclose(out3, ref3, atol=1e-5, rtol=1e-5)

    print("KERNEL_OK")
</pallas_src>

<mosaic_0001>
module attributes {stable_mosaic.version = 11 : i64} {
  func.func @_res_dyn_mlp_kernel(%arg0: i32, %arg1: memref<16x12xf32, #tpu.memory_space<vmem>>, %arg2: memref<12x128xbf16, #tpu.memory_space<vmem>>, %arg3: memref<128x128xbf16, #tpu.memory_space<vmem>>, %arg4: memref<128x3xbf16, #tpu.memory_space<vmem>>, %arg5: memref<8x128xf32, #tpu.memory_space<vmem>>, %arg6: memref<16x3xf32, #tpu.memory_space<vmem>>) attributes {dimension_semantics = [#tpu.dimension_semantics<parallel>], iteration_bounds = array<i64: 1>, scalar_prefetch = 0 : i64, scratch_operands = 0 : i64, tpu.core_type = #tpu.core_type<tc>, window_params = [{transform_indices = @transform_0, window_bounds = array<i64: 16, 12>}, {pipeline_mode = #tpu.pipeline_mode<synchronous>, transform_indices = @transform_1, window_bounds = array<i64: 12, 128>}, {pipeline_mode = #tpu.pipeline_mode<synchronous>, transform_indices = @transform_2, window_bounds = array<i64: 128, 128>}, {pipeline_mode = #tpu.pipeline_mode<synchronous>, transform_indices = @transform_3, window_bounds = array<i64: 128, 3>}, {pipeline_mode = #tpu.pipeline_mode<synchronous>, transform_indices = @transform_4, window_bounds = array<i64: 8, 128>}, {transform_indices = @transform_5, window_bounds = array<i64: 16, 3>}]} {
    %c0 = arith.constant 0 : index
    %c0_0 = arith.constant 0 : index
    %0 = vector.load %arg1[%c0, %c0_0] : memref<16x12xf32, #tpu.memory_space<vmem>>, vector<16x12xf32>
    %1 = arith.truncf %0 : vector<16x12xf32> to vector<16x12xbf16>
    %c0_1 = arith.constant 0 : index
    %c0_2 = arith.constant 0 : index
    %2 = vector.load %arg2[%c0_1, %c0_2] : memref<12x128xbf16, #tpu.memory_space<vmem>>, vector<12x128xbf16>
    %cst = arith.constant dense<0.000000e+00> : vector<16x128xf32>
    %3 = tpu.matmul %1, %2, %cst {dimension_numbers = #tpu.dot_dimension_numbers<[1], [0], [0], [1], [0, 0, 1, 1], [], []>} : vector<16x12xbf16>, vector<12x128xbf16>, vector<16x128xf32> -> vector<16x128xf32>
    %c0_3 = arith.constant 0 : index
    %c0_4 = arith.constant 0 : index
    %4 = vector.load %arg5[%c0_3, %c0_4] : memref<8x128xf32, #tpu.memory_space<vmem>>, vector<1x128xf32>
    %5 = vector.broadcast %4 : vector<1x128xf32> to vector<16x128xf32>
    %6 = arith.addf %3, %5 : vector<16x128xf32>
    %cst_5 = arith.constant 0.000000e+00 : f32
    %7 = vector.broadcast %cst_5 : f32 to vector<16x128xf32>
    %8 = arith.maximumf %6, %7 : vector<16x128xf32>
    %9 = arith.truncf %8 : vector<16x128xf32> to vector<16x128xbf16>
    %c0_6 = arith.constant 0 : index
    %c0_7 = arith.constant 0 : index
    %10 = vector.load %arg3[%c0_6, %c0_7] : memref<128x128xbf16, #tpu.memory_space<vmem>>, vector<128x128xbf16>
    %cst_8 = arith.constant dense<0.000000e+00> : vector<16x128xf32>
    %11 = tpu.matmul %9, %10, %cst_8 {dimension_numbers = #tpu.dot_dimension_numbers<[1], [0], [0], [1], [0, 0, 1, 1], [], []>} : vector<16x128xbf16>, vector<128x128xbf16>, vector<16x128xf32> -> vector<16x128xf32>
    %c1 = arith.constant 1 : index
    %c0_9 = arith.constant 0 : index
    %12 = vector.load %arg5[%c1, %c0_9] : memref<8x128xf32, #tpu.memory_space<vmem>>, vector<1x128xf32>
    %13 = vector.broadcast %12 : vector<1x128xf32> to vector<16x128xf32>
    %14 = arith.addf %11, %13 : vector<16x128xf32>
    %cst_10 = arith.constant 0.000000e+00 : f32
    %15 = vector.broadcast %cst_10 : f32 to vector<16x128xf32>
    %16 = arith.maximumf %14, %15 : vector<16x128xf32>
    %17 = arith.truncf %16 : vector<16x128xf32> to vector<16x128xbf16>
    %c0_11 = arith.constant 0 : index
    %c0_12 = arith.constant 0 : index
    %18 = vector.load %arg4[%c0_11, %c0_12] : memref<128x3xbf16, #tpu.memory_space<vmem>>, vector<128x3xbf16>
    %cst_13 = arith.constant dense<0.000000e+00> : vector<16x3xf32>
    %19 = tpu.matmul %17, %18, %cst_13 {dimension_numbers = #tpu.dot_dimension_numbers<[1], [0], [0], [1], [0, 0, 1, 1], [], []>} : vector<16x128xbf16>, vector<128x3xbf16>, vector<16x3xf32> -> vector<16x3xf32>
    %c2 = arith.constant 2 : index
    %c0_14 = arith.constant 0 : index
    %20 = vector.load %arg5[%c2, %c0_14] : memref<8x128xf32, #tpu.memory_space<vmem>>, vector<1x3xf32>
    %21 = vector.broadcast %20 : vector<1x3xf32> to vector<16x3xf32>
    %22 = arith.addf %19, %21 : vector<16x3xf32>
    %23 = math.tanh %22 : vector<16x3xf32>
    %c0_15 = arith.constant 0 : index
    %c0_16 = arith.constant 0 : index
    %24 = vector.load %arg6[%c0_15, %c0_16] : memref<16x3xf32, #tpu.memory_space<vmem>>, vector<16x3xf32>
    tpu.vector_store %arg6[%c0_15, %c0_16], %23 {strides = array<i32>} : memref<16x3xf32, #tpu.memory_space<vmem>>, vector<16x3xf32>,
    return
  }
  func.func @transform_0(%arg0: i32) -> (i32, i32) {
    %c0_i32 = arith.constant 0 : i32
    %c0_i32_0 = arith.constant 0 : i32
    return %arg0, %c0_i32 : i32, i32
  }
  func.func @transform_1(%arg0: i32) -> (i32, i32) {
    %c0_i32 = arith.constant 0 : i32
    %c0_i32_0 = arith.constant 0 : i32
    %c0_i32_1 = arith.constant 0 : i32
    return %c0_i32, %c0_i32_0 : i32, i32
  }
  func.func @transform_2(%arg0: i32) -> (i32, i32) {
    %c0_i32 = arith.constant 0 : i32
    %c0_i32_0 = arith.constant 0 : i32
    %c0_i32_1 = arith.constant 0 : i32
    return %c0_i32, %c0_i32_0 : i32, i32
  }
  func.func @transform_3(%arg0: i32) -> (i32, i32) {
    %c0_i32 = arith.constant 0 : i32
    %c0_i32_0 = arith.constant 0 : i32
    %c0_i32_1 = arith.constant 0 : i32
    return %c0_i32, %c0_i32_0 : i32, i32
  }
  func.func @transform_4(%arg0: i32) -> (i32, i32) {
    %c0_i32 = arith.constant 0 : i32
    %c0_i32_0 = arith.constant 0 : i32
    %c0_i32_1 = arith.constant 0 : i32
    return %c0_i32, %c0_i32_0 : i32, i32
  }
  func.func @transform_5(%arg0: i32) -> (i32, i32) {
    %c0_i32 = arith.constant 0 : i32
    %c0_i32_0 = arith.constant 0 : i32
    return %arg0, %c0_i32 : i32, i32
  }
}

</mosaic_0001>

<llo_original>
// kernel: _forward.1
$region0: #{_forward.1}
  #allocation0 [shape = 'u32[]', space=smem, size = 0x4, offset = 0x4, fixed_abs, tag = 'smem constant byte address 0x4 - core index']
  #allocation1 [shape = 'u32[144,128]{1,0:T(1,128)}', space=vmem, size = 0x12000, scoped, tag = 'internal scratch']
  %s0 = inlined_call_operand.vmem [shape: f32[16,12], index: 0, kind: input, shape index: {}]
  %s1 = inlined_call_operand.vmem [shape: bf16[12,128], index: 1, kind: input, shape index: {}]
  %s2 = inlined_call_operand.vmem [shape: bf16[128,128], index: 2, kind: input, shape index: {}]
  %s3 = inlined_call_operand.vmem [shape: bf16[128,3], index: 3, kind: input, shape index: {}]
  %s4 = inlined_call_operand.vmem [shape: f32[8,128], index: 4, kind: input, shape index: {}]
  %s5 = inlined_call_operand.vmem [shape: f32[16,3], index: 5, kind: output, shape index: {}]
  %s6 = sld [smem:[#allocation0]]
  $region30: #{_forward.1} parent=0
    _
  %s8 = ssub.s32 1, %s6
  %s9 = scalar_select 0, %s8, %s6
  // Predicated region
  $region2: #{_forward.1} parent=0 // pred_check
    _
  $region3: #{_forward.1} parent=0 // pred_check_branch
    %11 = sbr.rel (0) target = $region5
  $region4: #{_forward.1} parent=0 // pred_region
    _
  $region5: #{_forward.1} parent=0 // pred_fallthru
    _
  // Predicated region
  $region6: #{_forward.1} parent=0 // pred_check
    _
  $region7: #{_forward.1} parent=0 // pred_check_branch
    %13 = sbr.rel (0) target = $region9
  $region8: #{_forward.1} parent=0 // pred_region
    _
  $region9: #{_forward.1} parent=0 // pred_fallthru
    _
  // Predicated region
  $region10: #{_forward.1} parent=0 // pred_check
    _
  $region11: #{_forward.1} parent=0 // pred_check_branch
    %15 = sbr.rel (0) target = $region13
  $region12: #{_forward.1} parent=0 // pred_region
    _
  $region13: #{_forward.1} parent=0 // pred_fallthru
    _
  // Predicated region
  $region14: #{_forward.1} parent=0 // pred_check
    _
  $region15: #{_forward.1} parent=0 // pred_check_branch
    %17 = sbr.rel (0) target = $region17
  $region16: #{_forward.1} parent=0 // pred_region
    _
  $region17: #{_forward.1} parent=0 // pred_fallthru
    _
  // Predicated region
  $region18: #{_forward.1} parent=0 // pred_check
    _
  $region19: #{_forward.1} parent=0 // pred_check_branch
    %19 = sbr.rel (0) target = $region21
  $region20: #{_forward.1} parent=0 // pred_region
    _
  $region21: #{_forward.1} parent=0 // pred_fallthru
    _
  %v21 = vld [vmem:[%s0] sm:$0xff]
  %v22 = vld [vmem:[%s0 + $0x8] sm:$0xff]
  %v23 = vpack.c.bf16 %v22, %v21
  %v24 = vld [vmem:[%s1] sm:$0xf]
  %v25 = vld [vmem:[%s1 + $0x4] sm:$0x3]
  %v26 = vld [vmem:[%s4] sm:$0x1]
  %v27 = vlaneseq
  %v28 = vshrl.u32 %v27, 7
  %v29 = vsub.s32 0, %v28
  %v30 = vrot.slane %v26, %v29
  %v33 = vunpack.c.l.b16 %v24
  %v34 = vunpack.c.l.b16 %v25
  %v35 = vpack.c.b16 %v34, %v33
  %vm36 = vcmask 97280
  %v38 = vsel %vm36, %v23, 0
  %vm40 = vcmask 1045504
  %v42 = vsel %vm40, %v35, 0
  %44 = vmatprep.subr.bf16.mxu0 0
  %45 = vmatpush1.bf16.msra.mxu0 %v42
  %46 = vmatprep.subr.bf16.mxu0 0
  %47 = vmatpush1.bf16.msra.mxu0 0
  %48 = vmatprep.subr.bf16.mxu0 0
  %49 = vmatpush1.bf16.msra.mxu0 0
  %50 = vmatprep.subr.bf16.mxu0 0
  %51 = vmatpush1.bf16.msra.mxu0 0
  %52 = vmatprep.subr.bf16.mxu0 0
  %53 = vmatpush1.bf16.msra.mxu0 0
  %54 = vmatprep.subr.bf16.mxu0 0
  %55 = vmatpush1.bf16.msra.mxu0 0
  %56 = vmatprep.subr.bf16.mxu0 0
  %57 = vmatpush1.bf16.msra.mxu0 0
  %58 = vmatprep.subr.bf16.mxu0 0
  %59 = vmatpush1.bf16.msra.mxu0 0
  %60 = vmatprep.subr.bf16.mxu0 0
  %61 = vmatpush1.bf16.msra.mxu0 0
  %62 = vmatprep.subr.bf16.mxu0 0
  %63 = vmatpush1.bf16.msra.mxu0 0
  %64 = vmatprep.subr.bf16.mxu0 0
  %65 = vmatpush1.bf16.msra.mxu0 0
  %66 = vmatprep.subr.bf16.mxu0 0
  %67 = vmatpush1.bf16.msra.mxu0 0
  %68 = vmatprep.subr.bf16.mxu0 0
  %69 = vmatpush1.bf16.msra.mxu0 0
  %70 = vmatprep.subr.bf16.mxu0 0
  %71 = vmatpush1.bf16.msra.mxu0 0
  %72 = vmatprep.subr.bf16.mxu0 0
  %73 = vmatpush1.bf16.msra.mxu0 0
  %74 = vmatprep.subr.bf16.mxu0 0
  %75 = vmatpush1.bf16.msra.mxu0 0
  %76 = vmatprep.mubr.bf16.mxu0 0
  %77 = vmatmul.mubr.bf16.gmra.mrb[0].mxu0 %v38
  %v78 = vpop.f32.mrb[0].mxu0
  %v79 = vadd.f32 %v30, %v78
  %v80 = vpop.f32.mrb[0].mxu0
  %v81 = vpop.f32.mrb[0].mxu0
  %v82 = vadd.f32 %v30, %v81
  %v83 = vpop.f32.mrb[0].mxu0
  %84 = vdwg.mxu0
  %v85 = vmax.f32 %v79, 0.0
  %v86 = vmax.f32 %v82, 0.0
  %v87 = vpack.c.bf16 %v86, %v85
  %v88 = vld [vmem:[%s2] sm:$0xf]
  %v89 = vld [vmem:[%s2 + $0x4] sm:$0xf]
  %v90 = vld [vmem:[%s2 + $0x8] sm:$0xf]
  %v91 = vld [vmem:[%s2 + $0xc] sm:$0xf]
  %v92 = vld [vmem:[%s2 + $0x10] sm:$0xf]
  %v93 = vld [vmem:[%s2 + $0x14] sm:$0xf]
  %v94 = vld [vmem:[%s2 + $0x18] sm:$0xf]
  %v95 = vld [vmem:[%s2 + $0x1c] sm:$0xf]
  %v96 = vld [vmem:[%s2 + $0x20] sm:$0xf]
  %v97 = vld [vmem:[%s2 + $0x24] sm:$0xf]
  %v98 = vld [vmem:[%s2 + $0x28] sm:$0xf]
  %v99 = vld [vmem:[%s2 + $0x2c] sm:$0xf]
  %v100 = vld [vmem:[%s2 + $0x30] sm:$0xf]
  %v101 = vld [vmem:[%s2 + $0x34] sm:$0xf]
  %v102 = vld [vmem:[%s2 + $0x38] sm:$0xf]
  %v103 = vld [vmem:[%s2 + $0x3c] sm:$0xf]
  %v104 = vld [vmem:[%s4 + $0x1] sm:$0x1]
  %v105 = vlaneseq
  %v106 = vshrl.u32 %v105, 7
  %v107 = vsub.s32 0, %v106
  %v108 = vrot.slane %v104, %v107
  %v125 = vunpack.c.l.b16 %v88
  %v126 = vunpack.c.l.b16 %v89
  %v127 = vunpack.c.l.b16 %v90
  %v128 = vunpack.c.l.b16 %v91
  %v129 = vunpack.c.l.b16 %v92
  %v130 = vunpack.c.l.b16 %v93
  %v131 = vunpack.c.l.b16 %v94
  %v132 = vunpack.c.l.b16 %v95
  %v133 = vunpack.c.l.b16 %v96
  %v134 = vunpack.c.l.b16 %v97
  %v135 = vunpack.c.l.b16 %v98
  %v136 = vunpack.c.l.b16 %v99
  %v137 = vunpack.c.l.b16 %v100
  %v138 = vunpack.c.l.b16 %v101
  %v139 = vunpack.c.l.b16 %v102
  %v140 = vunpack.c.l.b16 %v103
  %v141 = vpack.c.b16 %v126, %v125
  %v142 = vpack.c.b16 %v128, %v127
  %v143 = vpack.c.b16 %v130, %v129
  %v144 = vpack.c.b16 %v132, %v131
  %v145 = vpack.c.b16 %v134, %v133
  %v146 = vpack.c.b16 %v136, %v135
  %v147 = vpack.c.b16 %v138, %v137
  %v148 = vpack.c.b16 %v140, %v139
  %157 = vmatprep.subr.bf16.mxu0 0
  %158 = vmatpush1.bf16.msra.mxu0 %v141
  %159 = vmatprep.subr.bf16.mxu0 0
  %160 = vmatpush1.bf16.msra.mxu0 %v142
  %161 = vmatprep.subr.bf16.mxu0 0
  %162 = vmatpush1.bf16.msra.mxu0 %v143
  %163 = vmatprep.subr.bf16.mxu0 0
  %164 = vmatpush1.bf16.msra.mxu0 %v144
  %165 = vmatprep.subr.bf16.mxu0 0
  %166 = vmatpush1.bf16.msra.mxu0 %v145
  %167 = vmatprep.subr.bf16.mxu0 0
  %168 = vmatpush1.bf16.msra.mxu0 %v146
  %169 = vmatprep.subr.bf16.mxu0 0
  %170 = vmatpush1.bf16.msra.mxu0 %v147
  %171 = vmatprep.subr.bf16.mxu0 0
  %172 = vmatpush1.bf16.msra.mxu0 %v148
  %173 = vmatprep.subr.bf16.mxu0 0
  %174 = vmatpush1.bf16.msra.mxu0 0
  %175 = vmatprep.subr.bf16.mxu0 0
  %176 = vmatpush1.bf16.msra.mxu0 0
  %177 = vmatprep.subr.bf16.mxu0 0
  %178 = vmatpush1.bf16.msra.mxu0 0
  %179 = vmatprep.subr.bf16.mxu0 0
  %180 = vmatpush1.bf16.msra.mxu0 0
  %181 = vmatprep.subr.bf16.mxu0 0
  %182 = vmatpush1.bf16.msra.mxu0 0
  %183 = vmatprep.subr.bf16.mxu0 0
  %184 = vmatpush1.bf16.msra.mxu0 0
  %185 = vmatprep.subr.bf16.mxu0 0
  %186 = vmatpush1.bf16.msra.mxu0 0
  %187 = vmatprep.subr.bf16.mxu0 0
  %188 = vmatpush1.bf16.msra.mxu0 0
  %189 = vmatprep.mubr.bf16.mxu0 0
  %190 = vmatmul.mubr.bf16.gmra.mrb[0].mxu0 %v87
  %v191 = vpop.f32.mrb[0].mxu0
  %v192 = vadd.f32 %v108, %v191
  %v193 = vpop.f32.mrb[0].mxu0
  %v194 = vpop.f32.mrb[0].mxu0
  %v195 = vadd.f32 %v108, %v194
  %v196 = vpop.f32.mrb[0].mxu0
  %197 = vdwg.mxu0
  %v198 = vmax.f32 %v192, 0.0
  %v199 = vmax.f32 %v195, 0.0
  %v200 = vpack.c.bf16 %v199, %v198
  %v201 = vld [vmem:[%s3] sm:$0xf]
  %v202 = vld [vmem:[%s3 + $0x4] sm:$0xf]
  %v203 = vld [vmem:[%s3 + $0x8] sm:$0xf]
  %v204 = vld [vmem:[%s3 + $0xc] sm:$0xf]
  %v205 = vld [vmem:[%s3 + $0x10] sm:$0xf]
  %v206 = vld [vmem:[%s3 + $0x14] sm:$0xf]
  %v207 = vld [vmem:[%s3 + $0x18] sm:$0xf]
  %v208 = vld [vmem:[%s3 + $0x1c] sm:$0xf]
  %v209 = vld [vmem:[%s3 + $0x20] sm:$0xf]
  %v210 = vld [vmem:[%s3 + $0x24] sm:$0xf]
  %v211 = vld [vmem:[%s3 + $0x28] sm:$0xf]
  %v212 = vld [vmem:[%s3 + $0x2c] sm:$0xf]
  %v213 = vld [vmem:[%s3 + $0x30] sm:$0xf]
  %v214 = vld [vmem:[%s3 + $0x34] sm:$0xf]
  %v215 = vld [vmem:[%s3 + $0x38] sm:$0xf]
  %v216 = vld [vmem:[%s3 + $0x3c] sm:$0xf]
  %v217 = vld [vmem:[%s4 + $0x2] sm:$0x1]
  %v218 = vlaneseq
  %v219 = vshrl.u32 %v218, 7
  %v220 = vsub.s32 0, %v219
  %v221 = vrot.slane %v217, %v220
  %v238 = vunpack.c.l.b16 %v201
  %v239 = vunpack.c.l.b16 %v202
  %v240 = vunpack.c.l.b16 %v203
  %v241 = vunpack.c.l.b16 %v204
  %v242 = vunpack.c.l.b16 %v205
  %v243 = vunpack.c.l.b16 %v206
  %v244 = vunpack.c.l.b16 %v207
  %v245 = vunpack.c.l.b16 %v208
  %v246 = vunpack.c.l.b16 %v209
  %v247 = vunpack.c.l.b16 %v210
  %v248 = vunpack.c.l.b16 %v211
  %v249 = vunpack.c.l.b16 %v212
  %v250 = vunpack.c.l.b16 %v213
  %v251 = vunpack.c.l.b16 %v214
  %v252 = vunpack.c.l.b16 %v215
  %v253 = vunpack.c.l.b16 %v216
  %v254 = vpack.c.b16 %v239, %v238
  %v255 = vpack.c.b16 %v241, %v240
  %v256 = vpack.c.b16 %v243, %v242
  %v257 = vpack.c.b16 %v245, %v244
  %v258 = vpack.c.b16 %v247, %v246
  %v259 = vpack.c.b16 %v249, %v248
  %v260 = vpack.c.b16 %v251, %v250
  %v261 = vpack.c.b16 %v253, %v252
  %270 = vmatprep.subr.bf16.mxu0 0
  %271 = vmatpush1.bf16.msra.mxu0 %v254
  %272 = vmatprep.subr.bf16.mxu0 0
  %273 = vmatpush1.bf16.msra.mxu0 %v255
  %274 = vmatprep.subr.bf16.mxu0 0
  %275 = vmatpush1.bf16.msra.mxu0 %v256
  %276 = vmatprep.subr.bf16.mxu0 0
  %277 = vmatpush1.bf16.msra.mxu0 %v257
  %278 = vmatprep.subr.bf16.mxu0 0
  %279 = vmatpush1.bf16.msra.mxu0 %v258
  %280 = vmatprep.subr.bf16.mxu0 0
  %281 = vmatpush1.bf16.msra.mxu0 %v259
  %282 = vmatprep.subr.bf16.mxu0 0
  %283 = vmatpush1.bf16.msra.mxu0 %v260
  %284 = vmatprep.subr.bf16.mxu0 0
  %285 = vmatpush1.bf16.msra.mxu0 %v261
  %286 = vmatprep.subr.bf16.mxu0 0
  %287 = vmatpush1.bf16.msra.mxu0 0
  %288 = vmatprep.subr.bf16.mxu0 0
  %289 = vmatpush1.bf16.msra.mxu0 0
  %290 = vmatprep.subr.bf16.mxu0 0
  %291 = vmatpush1.bf16.msra.mxu0 0
  %292 = vmatprep.subr.bf16.mxu0 0
  %293 = vmatpush1.bf16.msra.mxu0 0
  %294 = vmatprep.subr.bf16.mxu0 0
  %295 = vmatpush1.bf16.msra.mxu0 0
  %296 = vmatprep.subr.bf16.mxu0 0
  %297 = vmatpush1.bf16.msra.mxu0 0
  %298 = vmatprep.subr.bf16.mxu0 0
  %299 = vmatpush1.bf16.msra.mxu0 0
  %300 = vmatprep.subr.bf16.mxu0 0
  %301 = vmatpush1.bf16.msra.mxu0 0
  %302 = vmatprep.mubr.bf16.mxu0 0
  %303 = vmatmul.mubr.bf16.gmra.mrb[0].mxu0 %v200
  %v304 = vpop.f32.mrb[0].mxu0
  %v305 = vadd.f32 %v221, %v304
  %v306 = vpop.f32.mrb[0].mxu0
  %v307 = vpop.f32.mrb[0].mxu0
  %v308 = vadd.f32 %v221, %v307
  %v309 = vpop.f32.mrb[0].mxu0
  %310 = vdwg.mxu0
  %v311 = vtanh.pop %v305
  %v312 = vtanh.pop %v308
  %vm313 = vcmask 23552
  %314 = vst.msk [vmem:[%s5] sm:$0xff] %vm313, %v311
  %315 = vst.msk [vmem:[%s5 + $0x8] sm:$0xff] %vm313, %v312
  // Predicated region
  $region22: #{_forward.1} parent=0 // pred_check
    _
  $region23: #{_forward.1} parent=0 // pred_check_branch
    %317 = sbr.rel (0) target = $region25
  $region24: #{_forward.1} parent=0 // pred_region
    _
  $region25: #{_forward.1} parent=0 // pred_fallthru
    _
  // Predicated region
  $region26: #{_forward.1} parent=0 // pred_check
    _
  $region27: #{_forward.1} parent=0 // pred_check_branch
    %319 = sbr.rel (0) target = $region29
  $region28: #{_forward.1} parent=0 // pred_region
    _
  $region29: #{_forward.1} parent=0 // pred_fallthru
    _

</llo_original>
